<compile_context>
chip_gen: v5e
topology: v5e:2x2
jax: 0.10.0
libtpu: 0.0.40
codegen_flags: <defaults>
</compile_context>

<pallas_src>
import functools

import jax
import jax.numpy as jnp
from jax.experimental import pallas as pl
from jax.experimental.pallas import tpu as pltpu


# ---------------------------------------------------------------------------
# Kernels
# ---------------------------------------------------------------------------

def _linear_kernel(idx_ref, latent_ref, emb_ref, w_lat_ref, w_cond_ref, b_ref,
                   out_ref):
    # idx_ref    : SMEM (1,) int32     embedding index
    # latent_ref : VMEM (1, L)         latent row
    # emb_ref    : VMEM (4, 1, C)      embedding table, rows on leading axis
    # w_lat_ref  : VMEM (L, H)         W[:, :L].T  (pre-transposed, one-time)
    # w_cond_ref : VMEM (C, H)         W[:, L:].T  (pre-transposed, one-time)
    # b_ref      : VMEM (1, H)         bias
    # out_ref    : VMEM (1, H)
    idx = idx_ref[0]
    cond = emb_ref[idx]                                            # (1, C) plain load, no MXU
    acc = jnp.dot(latent_ref[...], w_lat_ref[...],
                  preferred_element_type=jnp.float32)              # (1, H)
    acc = acc + jnp.dot(cond, w_cond_ref[...],
                        preferred_element_type=jnp.float32)
    out_ref[...] = acc + b_ref[...]


def _concat_kernel(idx_ref, latent_pad_ref, emb_pad_ref, out_ref, *, l_lat):
    # linear=False path: hidden = cat(latent, embedding(x)).
    # latent_pad_ref : VMEM (1, L+C)     latent in lanes [:L], zeros elsewhere
    # emb_pad_ref    : VMEM (4, 1, L+C)  embedding rows in lanes [L:], zeros elsewhere
    # Single full-width lane-dense store; no partial stores at lane offset L.
    idx = idx_ref[0]
    cond_full = emb_pad_ref[idx]                                   # (1, L+C)
    lane = jax.lax.broadcasted_iota(jnp.int32, out_ref.shape, 1)
    out_ref[...] = jnp.where(lane < l_lat, latent_pad_ref[...], cond_full)


# ---------------------------------------------------------------------------
# Wrapper
# ---------------------------------------------------------------------------

def _vmem_spec():
    return pl.BlockSpec(memory_space=pltpu.MemorySpace.VMEM)


def _smem_spec():
    return pl.BlockSpec(memory_space=pltpu.MemorySpace.SMEM)


def prepare_params(params, latent_feat):
    """One-time parameter prep (hoisted out of the per-call forward)."""
    emb = params["embedding"].astype(jnp.float32)     # (4, C)
    w = params["weight"].astype(jnp.float32)          # (H, L+C)
    b = params["bias"].astype(jnp.float32)            # (H,)
    n_emb, cond_size = emb.shape
    hidden_size, latent_size = w.shape
    assert latent_size == latent_feat + cond_size, "latent_size mismatch"
    return {
        "l_lat": latent_feat,
        "cond_size": cond_size,
        "hidden_size": hidden_size,
        "latent_size": latent_size,
        # Rows on a leading, non-tiled axis -> in-kernel dynamic row load is a
        # simple address computation (no lane/sublane shuffles).
        "emb3d": emb.reshape(n_emb, 1, cond_size),
        # Same table pre-placed at lanes [L:] of a full-width row, for the
        # concat-only path's single lane-dense store.
        "emb3d_padded": jnp.pad(emb, ((0, 0), (latent_feat, 0))).reshape(
            n_emb, 1, latent_size),
        # Linear weight split along its input axis and pre-transposed so the
        # concat never has to be materialized on the linear path.
        "w_lat": jnp.transpose(w[:, :latent_feat]),    # (L, H)
        "w_cond": jnp.transpose(w[:, latent_feat:]),   # (C, H)
        "b2d": b.reshape(1, hidden_size),
    }


def hidden_embed_forward(latent, x, prep, linear=True):
    """Pallas equivalent of HiddenEmbed.forward(latent, x, linear)."""
    l_lat = prep["l_lat"]
    hidden_size = prep["hidden_size"]
    latent_size = prep["latent_size"]

    latent2d = latent.reshape(1, l_lat).astype(jnp.float32)
    idx = jnp.reshape(x, (1,)).astype(jnp.int32)

    if linear:
        out = pl.pallas_call(
            _linear_kernel,
            in_specs=[
                _smem_spec(),   # idx
                _vmem_spec(),   # latent
                _vmem_spec(),   # embedding table
                _vmem_spec(),   # W[:, :L].T
                _vmem_spec(),   # W[:, L:].T
                _vmem_spec(),   # bias
            ],
            out_specs=_vmem_spec(),
            out_shape=jax.ShapeDtypeStruct((1, hidden_size), jnp.float32),
        )(idx, latent2d, prep["emb3d"], prep["w_lat"], prep["w_cond"],
          prep["b2d"])
        return out.reshape(1, 1, hidden_size)

    # linear=False: concat only. Pad latent to full row width (tiny per-call
    # pad) so the kernel does a single lane-dense select + store; the table's
    # lane placement was done once in prepare_params.
    latent_pad = jnp.pad(latent2d, ((0, 0), (0, latent_size - l_lat)))
    out = pl.pallas_call(
        functools.partial(_concat_kernel, l_lat=l_lat),
        in_specs=[_smem_spec(), _vmem_spec(), _vmem_spec()],
        out_specs=_vmem_spec(),
        out_shape=jax.ShapeDtypeStruct((1, latent_size), jnp.float32),
    )(idx, latent_pad, prep["emb3d_padded"])
    return out.reshape(1, 1, latent_size)


def init_params(key, cond_size, latent_size, hidden_size):
    """Deterministic synthetic init matching PyTorch shapes/distributions."""
    k1, k2, k3 = jax.random.split(key, 3)
    # nn.Embedding(4, cond_size): N(0, 1)
    emb = jax.random.normal(k1, (4, cond_size), jnp.float32)
    # nn.Linear(latent_size, hidden_size): U(-1/sqrt(fan_in), 1/sqrt(fan_in))
    bound = 1.0 / float(latent_size) ** 0.5
    w = jax.random.uniform(k2, (hidden_size, latent_size), jnp.float32,
                           -bound, bound)
    b = jax.random.uniform(k3, (hidden_size,), jnp.float32, -bound, bound)
    return {"embedding": emb, "weight": w, "bias": b}


if __name__ == "__main__":
    cond_size = 8
    hidden_size = 32
    l_lat = 24                          # latent feature dim
    latent_size = l_lat + cond_size     # Linear input dim = 32

    key = jax.random.PRNGKey(0)
    kp, kl = jax.random.split(key)
    raw_params = init_params(kp, cond_size, latent_size, hidden_size)
    prep = prepare_params(raw_params, l_lat)   # one-time, not per call

    latent = jax.random.normal(kl, (1, 1, l_lat), jnp.float32)
    x = jnp.array(2, dtype=jnp.int32)   # index into the 4-entry embedding table

    out = hidden_embed_forward(latent, x, prep, linear=True)
    out = jax.block_until_ready(out)

    # Pure-JAX reference of the PyTorch forward (linear=True path).
    cond_ref = raw_params["embedding"][x].reshape(1, 1, -1)
    hidden_ref = jnp.concatenate([latent, cond_ref], axis=-1)
    ref = hidden_ref @ raw_params["weight"].T + raw_params["bias"]

    assert out.shape == (1, 1, hidden_size)
    assert jnp.allclose(out, ref, rtol=1e-3, atol=1e-3)

    # Also exercise the linear=False (concat-only) path.
    cat_out = jax.block_until_ready(
        hidden_embed_forward(latent, x, prep, linear=False))
    assert cat_out.shape == (1, 1, latent_size)
    assert jnp.allclose(cat_out, hidden_ref, rtol=1e-6, atol=1e-6)

    print("KERNEL_OK")
</pallas_src>

<mosaic_0001>
module attributes {stable_mosaic.version = 11 : i64} {
  func.func @_linear_kernel(%arg0: memref<1xi32, #tpu.memory_space<smem>>, %arg1: memref<1x24xf32, #tpu.memory_space<vmem>>, %arg2: memref<4x1x8xf32, #tpu.memory_space<vmem>>, %arg3: memref<24x32xf32, #tpu.memory_space<vmem>>, %arg4: memref<8x32xf32, #tpu.memory_space<vmem>>, %arg5: memref<1x32xf32, #tpu.memory_space<vmem>>, %arg6: memref<1x32xf32, #tpu.memory_space<vmem>>) attributes {dimension_semantics = [], scalar_prefetch = 0 : i64, scratch_operands = 0 : i64, tpu.core_type = #tpu.core_type<tc>} {
    %c0 = arith.constant 0 : index
    %0 = memref.load %arg0[%c0] : memref<1xi32, #tpu.memory_space<smem>>
    %1 = arith.index_cast %0 : i32 to index
    %c0_0 = arith.constant 0 : index
    %c0_1 = arith.constant 0 : index
    %2 = vector.load %arg2[%1, %c0_0, %c0_1] : memref<4x1x8xf32, #tpu.memory_space<vmem>>, vector<1x1x8xf32>
    %3 = vector.shape_cast %2 : vector<1x1x8xf32> to vector<1x8xf32>
    %c0_2 = arith.constant 0 : index
    %c0_3 = arith.constant 0 : index
    %4 = vector.load %arg1[%c0_2, %c0_3] : memref<1x24xf32, #tpu.memory_space<vmem>>, vector<1x24xf32>
    %c0_4 = arith.constant 0 : index
    %c0_5 = arith.constant 0 : index
    %5 = vector.load %arg3[%c0_4, %c0_5] : memref<24x32xf32, #tpu.memory_space<vmem>>, vector<24x32xf32>
    %cst = arith.constant dense<0.000000e+00> : vector<1x32xf32>
    %6 = tpu.matmul %4, %5, %cst {dimension_numbers = #tpu.dot_dimension_numbers<[1], [0], [0], [1], [0, 0, 1, 1], [], []>} : vector<1x24xf32>, vector<24x32xf32>, vector<1x32xf32> -> vector<1x32xf32>
    %c0_6 = arith.constant 0 : index
    %c0_7 = arith.constant 0 : index
    %7 = vector.load %arg4[%c0_6, %c0_7] : memref<8x32xf32, #tpu.memory_space<vmem>>, vector<8x32xf32>
    %cst_8 = arith.constant dense<0.000000e+00> : vector<1x32xf32>
    %8 = tpu.matmul %3, %7, %cst_8 {dimension_numbers = #tpu.dot_dimension_numbers<[1], [0], [0], [1], [0, 0, 1, 1], [], []>} : vector<1x8xf32>, vector<8x32xf32>, vector<1x32xf32> -> vector<1x32xf32>
    %9 = arith.addf %6, %8 : vector<1x32xf32>
    %c0_9 = arith.constant 0 : index
    %c0_10 = arith.constant 0 : index
    %10 = vector.load %arg5[%c0_9, %c0_10] : memref<1x32xf32, #tpu.memory_space<vmem>>, vector<1x32xf32>
    %11 = arith.addf %9, %10 : vector<1x32xf32>
    %c0_11 = arith.constant 0 : index
    %c0_12 = arith.constant 0 : index
    %12 = vector.load %arg6[%c0_11, %c0_12] : memref<1x32xf32, #tpu.memory_space<vmem>>, vector<1x32xf32>
    tpu.vector_store %arg6[%c0_11, %c0_12], %11 {strides = array<i32>} : memref<1x32xf32, #tpu.memory_space<vmem>>, vector<1x32xf32>,
    return
  }
}

</mosaic_0001>

<llo_original>
// kernel: tpu_custom_call.1
$region0: #{tpu_custom_call.1}
  #allocation0 [shape = 'u32[]', space=smem, size = 0x4, offset = 0x4, fixed_abs, tag = 'smem constant byte address 0x4 - core index']
  #allocation1 [shape = 'u32[72,128]{1,0:T(1,128)}', space=vmem, size = 0x9000, scoped, tag = 'internal scratch']
  #allocation2 [shape = 's32[1]{0:T(128)S(6)}', space=smem, size = 0x200, scoped, tag = 'scoped memory for tpu_custom_call.1']
  %s0 = inlined_call_operand.<no memory space> [shape: s32[1], index: 0, kind: input, shape index: {}]
  %s1 = inlined_call_operand.vmem [shape: f32[1,24], index: 1, kind: input, shape index: {}]
  %s2 = inlined_call_operand.hbm [shape: f32[4,1,8], index: 2, kind: input, shape index: {}]
  %s3 = inlined_call_operand.hbm [shape: f32[24,32], index: 3, kind: input, shape index: {}]
  %s4 = inlined_call_operand.hbm [shape: f32[8,32], index: 4, kind: input, shape index: {}]
  %s5 = inlined_call_operand.vmem [shape: f32[1,32], index: 5, kind: input, shape index: {}]
  %s6 = inlined_call_operand.hbm [shape: f32[1,32], index: 6, kind: output, shape index: {}]
  %s7 = sld [smem:[#allocation0]]
  $region46: #{tpu_custom_call.1} parent=0
    _
  %s9 = ssub.s32 1, %s7
  %s10 = scalar_select 0, %s9, %s7
  %11 = sst [smem:[#allocation2]] %s0
  $region1: #{tpu_custom_call.1} parent=0
    #allocation3 [shape = 'u8[2048]{0}', space=vmem, size = 0x800, scoped, tag = 'input window, operand 2, single buffered']
    #allocation4 [shape = 's32[1]{0}', space=sflag, size = 0x4, scoped, tag = 'scoped memory for tpu_custom_call.1']
    #allocation5 [shape = 's32[1]{0}', space=sflag, size = 0x4, scoped, tag = 'scoped memory for tpu_custom_call.1']
    #allocation6 [shape = 'u8[12288]{0}', space=vmem, size = 0x3000, scoped, tag = 'input window, operand 3, single buffered']
    #allocation7 [shape = 's32[1]{0}', space=sflag, size = 0x4, scoped, tag = 'scoped memory for tpu_custom_call.1']
    #allocation8 [shape = 'u8[4096]{0}', space=vmem, size = 0x1000, scoped, tag = 'input window, operand 4, single buffered']
    #allocation9 [shape = 'u8[512]{0}', space=vmem, size = 0x400, scoped, tag = 'output window, operand 0, single buffered']
    %12 = vsyncpa [#allocation4], 0
    %13 = vsyncpa [#allocation7], 0
    %14 = vsyncpa [#allocation5], 0
    // Predicated region
    $region2: #{tpu_custom_call.1} parent=1 // pred_check
      _
    $region3: #{tpu_custom_call.1} parent=1 // pred_check_branch
      %16 = sbr.rel (0) target = $region5
    $region4: #{tpu_custom_call.1} parent=1 // pred_region
      _
    $region5: #{tpu_custom_call.1} parent=1 // pred_fallthru
      _
    // Predicated region
    $region6: #{tpu_custom_call.1} parent=1 // pred_check
      _
    $region7: #{tpu_custom_call.1} parent=1 // pred_check_branch
      %18 = sbr.rel (0) target = $region9
    $region8: #{tpu_custom_call.1} parent=1 // pred_region
      _
    $region9: #{tpu_custom_call.1} parent=1 // pred_fallthru
      _
    // Predicated region
    $region10: #{tpu_custom_call.1} parent=1 // pred_check
      _
    $region11: #{tpu_custom_call.1} parent=1 // pred_check_branch
      %20 = sbr.rel (0) target = $region13
    $region12: #{tpu_custom_call.1} parent=1 // pred_region
      %22 = vsyncadd [#allocation4], 0
      %s23 = sshll.u32 %s2, 4
      %s24 = int_to_ptr.hbm [resolvable:$true] %s23
      %s25 = sshll.u32 [#allocation3], 4
      %s26 = int_to_ptr.vmem [resolvable:$true] %s25
      %31 = dma.hbm_to_vmem [thread:$0]  %s24, 64, %s26, [#allocation4], 16, 16, 1
    $region13: #{tpu_custom_call.1} parent=1 // pred_fallthru
      _
    // Predicated region
    $region14: #{tpu_custom_call.1} parent=1 // pred_check
      _
    $region15: #{tpu_custom_call.1} parent=1 // pred_check_branch
      %33 = sbr.rel (0) target = $region17
    $region16: #{tpu_custom_call.1} parent=1 // pred_region
      %35 = vsyncadd [#allocation7], 0
      %s36 = sshll.u32 %s3, 4
      %s37 = int_to_ptr.hbm [resolvable:$true] %s36
      %s38 = sshll.u32 [#allocation6], 4
      %s39 = int_to_ptr.vmem [resolvable:$true] %s38
      %44 = dma.hbm_to_vmem [thread:$0]  %s37, 384, %s39, [#allocation7], 128, 128, 8
    $region17: #{tpu_custom_call.1} parent=1 // pred_fallthru
      _
    // Predicated region
    $region18: #{tpu_custom_call.1} parent=1 // pred_check
      _
    $region19: #{tpu_custom_call.1} parent=1 // pred_check_branch
      %46 = sbr.rel (0) target = $region21
    $region20: #{tpu_custom_call.1} parent=1 // pred_region
      %48 = vsyncadd [#allocation7], 0
      %s50 = sshll.u32 %s4, 4
      %s51 = int_to_ptr.hbm [resolvable:$true] %s50
      %s52 = sshll.u32 [#allocation8], 4
      %s53 = int_to_ptr.vmem [resolvable:$true] %s52
      %55 = dma.hbm_to_vmem [thread:$0]  %s51, 128, %s53, [#allocation7]
    $region21: #{tpu_custom_call.1} parent=1 // pred_fallthru
      _
    // Predicated region
    $region22: #{tpu_custom_call.1} parent=1 // pred_check
      _
    $region23: #{tpu_custom_call.1} parent=1 // pred_check_branch
      %57 = sbr.rel (0) target = $region25
    $region24: #{tpu_custom_call.1} parent=1 // pred_region
      _
    $region25: #{tpu_custom_call.1} parent=1 // pred_fallthru
      _
    // Predicated region
    $region26: #{tpu_custom_call.1} parent=1 // pred_check
      _
    $region27: #{tpu_custom_call.1} parent=1 // pred_check_branch
      %59 = sbr.rel (0) target = $region29
    $region28: #{tpu_custom_call.1} parent=1 // pred_region
      %61 = dma.done [#allocation4], 64
    $region29: #{tpu_custom_call.1} parent=1 // pred_fallthru
      _
    // Predicated region
    $region30: #{tpu_custom_call.1} parent=1 // pred_check
      _
    $region31: #{tpu_custom_call.1} parent=1 // pred_check_branch
      %63 = sbr.rel (0) target = $region33
    $region32: #{tpu_custom_call.1} parent=1 // pred_region
      %65 = dma.done [#allocation7], 384
    $region33: #{tpu_custom_call.1} parent=1 // pred_fallthru
      _
    // Predicated region
    $region34: #{tpu_custom_call.1} parent=1 // pred_check
      _
    $region35: #{tpu_custom_call.1} parent=1 // pred_check_branch
      %67 = sbr.rel (0) target = $region37
    $region36: #{tpu_custom_call.1} parent=1 // pred_region
      %69 = dma.done [#allocation7], 128
    $region37: #{tpu_custom_call.1} parent=1 // pred_fallthru
      _
    %s70 = sld [smem:[#allocation2]]
    %s71 = scalar_lea.vmem [#allocation3], %s70
    %v72 = vld [vmem:[%s71] sm:$0x1]
    %v73 = vld [vmem:[%s1] sm:$0x1]
    %v74 = vld [vmem:[#allocation6] sm:$0xff]
    %v75 = vld [vmem:[#allocation6 + $0x8] sm:$0xff]
    %v76 = vld [vmem:[#allocation6 + $0x10] sm:$0xff]
    %v77 = vld [vmem:[#allocation8] sm:$0xff]
    %vm78 = vcmask 64512
    %v80 = vsel %vm78, %v72, 0
    %82 = vmatpush.msra.mxu0 0.0
    %83 = vmatpush.msra.mxu0 0.0
    %84 = vmatpush.msra.mxu0 0.0
    %85 = vmatpush.msra.mxu0 0.0
    %86 = vmatpush.msra.mxu0 0.0
    %87 = vmatpush.msra.mxu0 0.0
    %88 = vmatpush.msra.mxu0 0.0
    %89 = vmatpush.msra.mxu0 0.0
    %90 = vmatpush.msra.mxu0 0.0
    %91 = vmatpush.msra.mxu0 0.0
    %92 = vmatpush.msra.mxu0 0.0
    %93 = vmatpush.msra.mxu0 0.0
    %94 = vmatpush.msra.mxu0 0.0
    %95 = vmatpush.msra.mxu0 0.0
    %96 = vmatpush.msra.mxu0 0.0
    %97 = vmatpush.msra.mxu0 %v77
    %98 = vmatmul.f32.gmra.mxu0 %v80
    %v99 = vpop.f32.mrf.mxu0
    %v100 = vadd.f32 0.0, %v99
    %101 = vdwg.mxu0
    %vm102 = vcmask 195584
    %v104 = vsel %vm102, %v73, 0
    %106 = vmatpush.msra.mxu0 0.0
    %107 = vmatpush.msra.mxu0 0.0
    %108 = vmatpush.msra.mxu0 0.0
    %109 = vmatpush.msra.mxu0 0.0
    %110 = vmatpush.msra.mxu0 0.0
    %111 = vmatpush.msra.mxu0 0.0
    %112 = vmatpush.msra.mxu0 0.0
    %113 = vmatpush.msra.mxu0 0.0
    %114 = vmatpush.msra.mxu0 0.0
    %115 = vmatpush.msra.mxu0 0.0
    %116 = vmatpush.msra.mxu0 0.0
    %117 = vmatpush.msra.mxu0 0.0
    %118 = vmatpush.msra.mxu0 0.0
    %119 = vmatpush.msra.mxu0 %v76
    %120 = vmatpush.msra.mxu0 %v75
    %121 = vmatpush.msra.mxu0 %v74
    %122 = vmatmul.f32.gmra.mxu0 %v104
    %v123 = vpop.f32.mrf.mxu0
    %v124 = vadd.f32 %v100, %v123
    %125 = vdwg.mxu0
    %v126 = vld [vmem:[%s5] sm:$0x1]
    %v127 = vadd.f32 %v124, %v126
    %vm128 = vcmask 253952
    %129 = vst.msk [vmem:[#allocation9] sm:$0x1] %vm128, %v127
    // Predicated region
    $region38: #{tpu_custom_call.1} parent=1 // pred_check
      _
    $region39: #{tpu_custom_call.1} parent=1 // pred_check_branch
      %131 = sbr.rel (0) target = $region41
    $region40: #{tpu_custom_call.1} parent=1 // pred_region
      %133 = vsyncadd [#allocation5], 0
      %s135 = sshll.u32 [#allocation9], 4
      %s136 = int_to_ptr.vmem [resolvable:$true] %s135
      %s137 = sshll.u32 %s6, 4
      %s138 = int_to_ptr.hbm [resolvable:$true] %s137
      %140 = dma.vmem_to_hbm [thread:$0]  %s136, 16, %s138, [#allocation5]
    $region41: #{tpu_custom_call.1} parent=1 // pred_fallthru
      _
    // Predicated region
    $region42: #{tpu_custom_call.1} parent=1 // pred_check
      _
    $region43: #{tpu_custom_call.1} parent=1 // pred_check_branch
      %142 = sbr.rel (0) target = $region45
    $region44: #{tpu_custom_call.1} parent=1 // pred_region
      %144 = dma.done [#allocation5], 16
    $region45: #{tpu_custom_call.1} parent=1 // pred_fallthru
      _
    %145 = vsyncpa [#allocation4], 1
    %146 = vsyncpa [#allocation7], 1
    %147 = vsyncpa [#allocation5], 1

</llo_original>
